<compile_context>
chip_gen: v5e
topology: v5e:2x2
jax: 0.10.0
libtpu: 0.0.40
codegen_flags: <defaults>
</compile_context>

<pallas_src>
import functools

import jax
import jax.numpy as jnp
from jax.experimental import pallas as pl
from jax.experimental.pallas import tpu as pltpu


def _copy_kernel(x_ref, o_ref):
    # The Ts slice already happened in the index_map; single full-tile store.
    o_ref[...] = x_ref[...]


def _slice_kernel(col_start, ncols, x_ref, o_ref):
    # Fallback path: x_ref is (TT, Ts*C); statically slice the last C columns.
    o_ref[...] = x_ref[:, col_start:col_start + ncols]


def _pick_row_block(rows, row_bytes, dtype, budget_bytes=2 * 1024 * 1024):
    """Row-block size: as big as the VMEM budget allows, sublane-aligned."""
    sub = max(8, 32 // jnp.dtype(dtype).itemsize)   # 8 f32 / 16 bf16 / 32 int8
    if rows <= sub:
        return rows                                  # full extent: always legal
    tt = max(sub, (budget_bytes // max(1, row_bytes)) // sub * sub)
    return min(tt, rows)


def unidir_cell_forward(x, need_attention_weights=False, *, block_rows=None):
    """Pallas equivalent of UnidirCell.forward: returns (x[:, :, -1], None)."""
    del need_attention_weights  # the PyTorch module ignores it too
    B, Tt, Ts, C = x.shape
    rows = B * Tt
    xr = x.reshape(rows, Ts * C)                     # free, contiguous view
    itemsize = jnp.dtype(x.dtype).itemsize

    if C % 128 == 0:
        # Only DMA the last-source-position columns: block (TT, C) at block
        # column index Ts-1 -> element offset (Ts-1)*C.  Lane-dense in & out.
        in_block_cols = C
        in_index_map = lambda i: (i, Ts - 1)
        kernel = _copy_kernel
    else:
        # Last block dim must be a multiple of 128 or the full dim: fall back
        # to full-width rows and slice in-kernel.
        in_block_cols = Ts * C
        in_index_map = lambda i: (i, 0)
        kernel = functools.partial(_slice_kernel, (Ts - 1) * C, C)

    if block_rows is None:
        block_rows = _pick_row_block(rows, in_block_cols * itemsize, x.dtype)
    grid = (pl.cdiv(rows, block_rows),)

    out = pl.pallas_call(
        kernel,
        out_shape=jax.ShapeDtypeStruct((rows, C), x.dtype),
        grid=grid,
        in_specs=[pl.BlockSpec((block_rows, in_block_cols), in_index_map)],
        out_specs=pl.BlockSpec((block_rows, C), lambda i: (i, 0)),
        compiler_params=pltpu.CompilerParams(
            dimension_semantics=("parallel",),
            vmem_limit_bytes=32 * 1024 * 1024),
    )(xr)
    return out.reshape(B, Tt, C), None


def unidir_cell_one_step(x):
    """UnidirCell.one_step: the second definition shadows the first and just
    calls forward()."""
    # TODO(synk): the first (shadowed) one_step(x, need_attention_weights)
    # variant is dead code in the PyTorch class and is not implemented.
    return unidir_cell_forward(x)


def _ref_forward(x):
    return x[:, :, -1, :]


if __name__ == "__main__":
    key = jax.random.PRNGKey(0)

    # Main path: C multiple of 128 -> slice-only DMA, lane-dense blocks.
    B, Tt, Ts, C = 2, 8, 8, 128
    x = jax.random.normal(key, (B, Tt, Ts, C), dtype=jnp.float32)

    out, attn = unidir_cell_forward(x)
    out = jax.block_until_ready(out)
    assert attn is None
    assert out.shape == (B, Tt, C)
    assert jnp.allclose(out, _ref_forward(x)), "main path mismatch"

    # Same path, forcing a multi-step grid (exercises the row index_map).
    out_multi, _ = unidir_cell_forward(x, block_rows=8)
    jax.block_until_ready(out_multi)
    assert jnp.allclose(out_multi, _ref_forward(x)), "multi-step grid mismatch"

    # Fallback path: C not a multiple of 128 -> full-row blocks, in-kernel slice.
    B2, Tt2, Ts2, C2 = 2, 8, 8, 32
    x2 = jax.random.normal(jax.random.PRNGKey(1), (B2, Tt2, Ts2, C2),
                           dtype=jnp.float32)
    out2, _ = unidir_cell_forward(x2)
    jax.block_until_ready(out2)
    assert out2.shape == (B2, Tt2, C2)
    assert jnp.allclose(out2, _ref_forward(x2)), "fallback path mismatch"

    # one_step == forward
    step_out, step_attn = unidir_cell_one_step(x)
    jax.block_until_ready(step_out)
    assert step_out.shape == (B, Tt, C) and step_attn is None

    print("KERNEL_OK")
</pallas_src>

<mosaic_0001>
module attributes {stable_mosaic.version = 11 : i64} {
  func.func @_copy_kernel(%arg0: i32, %arg1: memref<16x128xf32, #tpu.memory_space<vmem>>, %arg2: memref<16x128xf32, #tpu.memory_space<vmem>>) attributes {dimension_semantics = [#tpu.dimension_semantics<parallel>], iteration_bounds = array<i64: 1>, scalar_prefetch = 0 : i64, scratch_operands = 0 : i64, tpu.core_type = #tpu.core_type<tc>, window_params = [{transform_indices = @transform_0, window_bounds = array<i64: 16, 128>}, {transform_indices = @transform_1, window_bounds = array<i64: 16, 128>}]} {
    %c0 = arith.constant 0 : index
    %c0_0 = arith.constant 0 : index
    %0 = vector.load %arg1[%c0, %c0_0] : memref<16x128xf32, #tpu.memory_space<vmem>>, vector<16x128xf32>
    %c0_1 = arith.constant 0 : index
    %c0_2 = arith.constant 0 : index
    %1 = vector.load %arg2[%c0_1, %c0_2] : memref<16x128xf32, #tpu.memory_space<vmem>>, vector<16x128xf32>
    tpu.vector_store %arg2[%c0_1, %c0_2], %0 {strides = array<i32>} : memref<16x128xf32, #tpu.memory_space<vmem>>, vector<16x128xf32>,
    return
  }
  func.func @transform_0(%arg0: i32) -> (i32, i32) {
    %c7_i32 = arith.constant 7 : i32
    %c0_i32 = arith.constant 0 : i32
    return %arg0, %c7_i32 : i32, i32
  }
  func.func @transform_1(%arg0: i32) -> (i32, i32) {
    %c0_i32 = arith.constant 0 : i32
    %c0_i32_0 = arith.constant 0 : i32
    return %arg0, %c0_i32 : i32, i32
  }
}

</mosaic_0001>

<llo_original>
// kernel: tpu_custom_call.1
$region0: #{tpu_custom_call.1}
  #allocation0 [shape = 'u32[]', space=smem, size = 0x4, offset = 0x4, fixed_abs, tag = 'smem constant byte address 0x4 - core index']
  #allocation1 [shape = 'u32[72,128]{1,0:T(1,128)}', space=vmem, size = 0x9000, scoped, tag = 'internal scratch']
  %s0 = inlined_call_operand.hbm [shape: f32[16,1024], index: 0, kind: input, shape index: {}]
  %s1 = inlined_call_operand.hbm [shape: f32[16,128], index: 1, kind: output, shape index: {}]
  %s2 = sld [smem:[#allocation0]]
  $region18: #{tpu_custom_call.1} parent=0
    _
  %s4 = ssub.s32 1, %s2
  %s5 = scalar_select 0, %s4, %s2
  $region1: #{tpu_custom_call.1} parent=0
    #allocation2 [shape = 'u8[8192]{0}', space=vmem, size = 0x2000, scoped, tag = 'input window, operand 0, single buffered']
    #allocation3 [shape = 's32[1]{0}', space=sflag, size = 0x4, scoped, tag = 'scoped memory for tpu_custom_call.1']
    #allocation4 [shape = 's32[1]{0}', space=sflag, size = 0x4, scoped, tag = 'scoped memory for tpu_custom_call.1']
    #allocation5 [shape = 'u8[8192]{0}', space=vmem, size = 0x2000, scoped, tag = 'output window, operand 0, single buffered']
    %6 = vsyncpa [#allocation3], 0
    %7 = vsyncpa [#allocation4], 0
    // Predicated region
    $region2: #{tpu_custom_call.1} parent=1 // pred_check
      _
    $region3: #{tpu_custom_call.1} parent=1 // pred_check_branch
      %9 = sbr.rel (0) target = $region5
    $region4: #{tpu_custom_call.1} parent=1 // pred_region
      %11 = vsyncadd [#allocation3], 0
      %s12 = scalar_lea.hbm %s0, 56
      %s13 = sshll.u32 %s12, 4
      %s14 = int_to_ptr.hbm [resolvable:$true] %s13
      %s15 = sshll.u32 [#allocation2], 4
      %s16 = int_to_ptr.vmem [resolvable:$true] %s15
      %21 = dma.hbm_to_vmem [thread:$0]  %s14, 256, %s16, [#allocation3], 1024, 128, 8
    $region5: #{tpu_custom_call.1} parent=1 // pred_fallthru
      _
    // Predicated region
    $region6: #{tpu_custom_call.1} parent=1 // pred_check
      _
    $region7: #{tpu_custom_call.1} parent=1 // pred_check_branch
      %23 = sbr.rel (0) target = $region9
    $region8: #{tpu_custom_call.1} parent=1 // pred_region
      %25 = dma.done [#allocation3], 256
    $region9: #{tpu_custom_call.1} parent=1 // pred_fallthru
      _
    %v26 = vld [vmem:[#allocation2] sm:$0xff]
    %v27 = vld [vmem:[#allocation2 + $0x8] sm:$0xff]
    %28 = vst [vmem:[#allocation5] sm:$0xff] %v26
    %29 = vst [vmem:[#allocation5 + $0x8] sm:$0xff] %v27
    // Predicated region
    $region10: #{tpu_custom_call.1} parent=1 // pred_check
      _
    $region11: #{tpu_custom_call.1} parent=1 // pred_check_branch
      %31 = sbr.rel (0) target = $region13
    $region12: #{tpu_custom_call.1} parent=1 // pred_region
      %33 = vsyncadd [#allocation4], 0
      %s34 = sshll.u32 [#allocation5], 4
      %s35 = int_to_ptr.vmem [resolvable:$true] %s34
      %s36 = sshll.u32 %s1, 4
      %s37 = int_to_ptr.hbm [resolvable:$true] %s36
      %42 = dma.vmem_to_hbm [thread:$0]  %s35, 256, %s37, [#allocation4], 128, 128, 8
    $region13: #{tpu_custom_call.1} parent=1 // pred_fallthru
      _
    // Predicated region
    $region14: #{tpu_custom_call.1} parent=1 // pred_check
      _
    $region15: #{tpu_custom_call.1} parent=1 // pred_check_branch
      %44 = sbr.rel (0) target = $region17
    $region16: #{tpu_custom_call.1} parent=1 // pred_region
      %46 = dma.done [#allocation4], 256
    $region17: #{tpu_custom_call.1} parent=1 // pred_fallthru
      _
    %47 = vsyncpa [#allocation3], 1
    %48 = vsyncpa [#allocation4], 1

</llo_original>
